<compile_context>
chip_gen: v5e
topology: v5e:2x2
jax: 0.10.0
libtpu: 0.0.40
codegen_flags: <defaults>
</compile_context>

<pallas_src>
import math

import jax
import jax.numpy as jnp
from jax.experimental import pallas as pl
from jax.experimental.pallas import tpu as pltpu


def _flatten_copy_kernel(x_hbm_ref, o_hbm_ref, sem):
    # x_hbm_ref / o_hbm_ref: full (N, flat) arrays left in place (HBM).
    # One contiguous HBM->HBM DMA moves everything; no VMEM round trip.
    copy = pltpu.make_async_copy(x_hbm_ref, o_hbm_ref, sem)
    copy.start()
    copy.wait()


def flatten(x):
    """Pallas equivalent of torch.nn.Flatten-style x.view(x.size(0), -1)."""
    n = x.shape[0]
    flat = math.prod(x.shape[1:]) if x.ndim > 1 else 1

    # Metadata-only reshape in the wrapper (== torch .view row-major ordering
    # on a contiguous NCHW tensor). The kernel never sees the 4-D, lane-padded
    # layout, so no cross-(8,128)-tile relayout work is generated.
    x2 = jnp.reshape(x, (n, flat))

    return pl.pallas_call(
        _flatten_copy_kernel,
        out_shape=jax.ShapeDtypeStruct((n, flat), x.dtype),
        in_specs=[pl.BlockSpec(memory_space=pl.ANY)],
        out_specs=pl.BlockSpec(memory_space=pl.ANY),
        scratch_shapes=[pltpu.SemaphoreType.DMA],
    )(x2)


if __name__ == "__main__":
    key = jax.random.PRNGKey(0)
    # Small NCHW input consistent with a typical conv feature map.
    x = jax.random.normal(key, (2, 4, 16, 16), dtype=jnp.float32)

    out = flatten(x)
    out = jax.block_until_ready(out)

    # Verify semantics against plain JAX reshape (== torch .view on contiguous NCHW).
    expected = x.reshape(x.shape[0], -1)
    assert out.shape == (2, 4 * 16 * 16)
    assert out.dtype == x.dtype
    assert jnp.array_equal(out, expected)

    print("KERNEL_OK")
</pallas_src>

<mosaic_0001>
module attributes {stable_mosaic.version = 11 : i64} {
  func.func @_flatten_copy_kernel(%arg0: memref<2x1024xf32, #tpu.memory_space<any>>, %arg1: memref<2x1024xf32, #tpu.memory_space<any>>, %arg2: memref<!tpu.dma_semaphore, #tpu.memory_space<semaphore_mem>>) attributes {dimension_semantics = [], scalar_prefetch = 0 : i64, scratch_operands = 1 : i64, tpu.core_type = #tpu.core_type<tc>} {
    tpu.enqueue_dma source(%arg0 : memref<2x1024xf32, #tpu.memory_space<any>>) target(%arg1 : memref<2x1024xf32, #tpu.memory_space<any>>) target_semaphore(%arg2 : memref<!tpu.dma_semaphore, #tpu.memory_space<semaphore_mem>>)
    tpu.wait_dma2 semaphore(%arg2 : memref<!tpu.dma_semaphore, #tpu.memory_space<semaphore_mem>>) src(%arg0 : memref<2x1024xf32, #tpu.memory_space<any>>) dst(%arg1 : memref<2x1024xf32, #tpu.memory_space<any>>)
    return
  }
}

</mosaic_0001>

<llo_original>
// kernel: tpu_custom_call.1
$region0: #{tpu_custom_call.1}
  #allocation0 [shape = 'u32[]', space=smem, size = 0x4, offset = 0x4, fixed_abs, tag = 'smem constant byte address 0x4 - core index']
  #allocation1 [shape = 'u32[72,128]{1,0:T(1,128)}', space=vmem, size = 0x9000, scoped, tag = 'internal scratch']
  #allocation2 [shape = 's32[1]{0}', space=sflag, size = 0x4, scoped, tag = 'scratch operand']
  #allocation3 [shape = 's32[]', space=sflag, size = 0x4, offset = 0, fixed_abs, tag = 'sflag constant byte address 0x0 - dummy sync flag']
  #allocation4 [shape = 'u32[0]{0}', space=smem, size = 0, offset = 0, fixed_abs, tag = 'smem constant byte address 0x0 - null']
  %s0 = inlined_call_operand.hbm [shape: f32[2,1024], index: 0, kind: input, shape index: {}]
  %s1 = inlined_call_operand.hbm [shape: f32[2,1024], index: 1, kind: output, shape index: {}]
  %s2 = sld [smem:[#allocation0]]
  $region2: #{tpu_custom_call.1} parent=0
    _
  %s4 = ssub.s32 1, %s2
  %s5 = scalar_select 0, %s4, %s2
  %s7 = sshll.u32 1, 14
  %s8 = sxor.u32 4294967295, %s7
  %s10 = sshll.u32 %s0, 4
  %s11 = int_to_ptr.hbm [resolvable:$true] %s10
  %s12 = sshll.u32 %s1, 4
  %s13 = int_to_ptr.hbm [resolvable:$true] %s12
  %16 = dma.general %s11, 256, %s13, [#allocation2], [#allocation3], [#allocation4], 0, 0
  %s17 = smul.u32 2, 1
  %s18 = smul.u32 %s17, 8
  %s19 = sshll.u32 %s18, 4
  %20 = dma.done [#allocation2], %s19
  %21 = vsyncmov [#allocation2]
  %s22 = vpop.sfrf %21
  %p23 = scmp.eq.s32.totalorder %s22, 0
  %p24 = pneg %p23
  %26 = shalt.err (%p24)

</llo_original>
